<compile_context>
chip_gen: v7x
topology: tpu7x:2x2x1
jax: 0.10.0
libtpu: 0.0.40
codegen_flags: <defaults>
</compile_context>

<pallas_src>
import jax
import jax.numpy as jnp
from jax.experimental import pallas as pl
from jax.experimental.pallas import tpu as pltpu


def _round_up(v, m):
    return (v + m - 1) // m * m


def _pick_tile(dim_p, pref):
    """Largest multiple-of-128 tile <= pref that divides dim_p (dim_p is a 128-multiple)."""
    cap = max(128, min(pref, dim_p) // 128 * 128)
    for t in range(cap, 127, -128):
        if dim_p % t == 0:
            return t
    return 128


def _vmem_capacity_bytes():
    cap = 64 * 1024 * 1024  # conservative default = v7x physical VMEM per TensorCore
    try:
        cap = int(getattr(pltpu.get_tpu_info(), "vmem_capacity_bytes", cap))
    except Exception:
        pass
    return cap


# ----------------------------- kernels ---------------------------------------
def _linear_kernel_inplace(x_ref, w_ref, o_ref):
    """f32 output: accumulate directly into the resident output block (no scratch)."""
    k = pl.program_id(2)
    p = jnp.dot(x_ref[...], w_ref[...], preferred_element_type=jnp.float32)

    @pl.when(k == 0)
    def _():
        o_ref[...] = p

    @pl.when(k > 0)
    def _():
        o_ref[...] += p


def _linear_kernel_acc(x_ref, w_ref, o_ref, acc_ref):
    """Non-f32 output: f32 VMEM accumulator, single cast/store on the last K step."""
    k = pl.program_id(2)
    p = jnp.dot(x_ref[...], w_ref[...], preferred_element_type=jnp.float32)

    @pl.when(k == 0)
    def _():
        acc_ref[...] = p

    @pl.when(k > 0)
    def _():
        acc_ref[...] += p

    @pl.when(k == pl.num_programs(2) - 1)
    def _():
        o_ref[...] = acc_ref[...].astype(o_ref.dtype)


# ----------------------------- wrapper ---------------------------------------
def prepare_weight(weight, *, compute_dtype=None):
    """One-time prep of an nn.Linear weight (out_features, in_features):
    transpose to (K, N) so the kernel contracts on the RHS sublane axis (no per-tile
    transposes), optional bf16 cast, zero-pad K/N to 128-multiples so no per-call
    weight padding/copies are ever needed."""
    N, K = weight.shape
    w_kn = jnp.asarray(weight).T
    if compute_dtype is not None and w_kn.dtype != jnp.dtype(compute_dtype):
        w_kn = w_kn.astype(compute_dtype)
    Kp, Np = _round_up(K, 128), _round_up(N, 128)
    if (Kp, Np) != (K, N):
        w_kn = jnp.pad(w_kn, ((0, Kp - K), (0, Np - N)))
    return {"w_kn": w_kn, "in_features": K, "out_features": N}


def _select_tiles(Bp, Kp, Np, in_isz, out_isz, budget, tile_b, tile_n, tile_k):
    tb = min(_round_up(tile_b if tile_b is not None else 1024, 8), Bp)
    tn = _pick_tile(Np, tile_n if tile_n is not None else 1024)
    tk = _pick_tile(Kp, tile_k if tile_k is not None else 2048)

    def working_set(tb, tn, tk):
        # double-buffered x / W / out slabs + worst-case f32 accumulator scratch
        return ((2 * tb * tk + 2 * tk * tn) * in_isz
                + 2 * tb * tn * out_isz + tb * tn * 4)

    # Shrink K first (only adds accumulation steps), then N, then batch last
    # (splitting batch re-reads the whole weight from HBM).
    while working_set(tb, tn, tk) > budget:
        if tk > 256:
            tk = _pick_tile(Kp, tk // 2)
        elif tn > 256:
            tn = _pick_tile(Np, tn // 2)
        elif tb >= 16:
            tb = max(8, (tb // 2) // 8 * 8)
        else:
            break

    # Megacore: guarantee >=2 steps along a "parallel" axis so v7x's 2 TensorCores
    # both get work.  Splitting N keeps total weight HBM traffic unchanged.
    grid_b = _round_up(Bp, tb) // tb
    if tile_n is None and grid_b == 1 and Np // tn == 1 and Np >= 256:
        tn = _pick_tile(Np, Np // 2)
    return tb, tn, tk


def linear_forward(x, prepared, *, tile_b=None, tile_n=None, tile_k=None,
                   w_buffer_count=2):
    """y = x @ weight.T using the prepared (K, N) weight."""
    w_kn = prepared["w_kn"]
    K, N = prepared["in_features"], prepared["out_features"]
    B, Kx = x.shape
    assert Kx == K, "in_features mismatch"

    out_dtype = x.dtype
    x_c = x if x.dtype == w_kn.dtype else x.astype(w_kn.dtype)  # opt-in bf16 path

    Kp, Np = w_kn.shape
    Bp = _round_up(B, 8)
    in_isz = jnp.dtype(w_kn.dtype).itemsize
    out_isz = jnp.dtype(out_dtype).itemsize

    cap = _vmem_capacity_bytes()
    budget = int(cap * 0.75)
    tb, tn, tk = _select_tiles(Bp, Kp, Np, in_isz, out_isz, budget,
                               tile_b, tile_n, tile_k)

    Bp = _round_up(Bp, tb)
    if (Bp, Kp) != (B, K):
        x_c = jnp.pad(x_c, ((0, Bp - B), (0, Kp - K)))  # only x is padded per call

    grid = (Bp // tb, Np // tn, Kp // tk)
    grid_b, grid_n = grid[0], grid[1]

    inplace = jnp.dtype(out_dtype) == jnp.dtype(jnp.float32)
    kernel = _linear_kernel_inplace if inplace else _linear_kernel_acc
    scratch = [] if inplace else [pltpu.VMEM((tb, tn), jnp.float32)]

    need = ((2 * tb * tk + 2 * tk * tn) * in_isz + 2 * tb * tn * out_isz
            + (0 if inplace else tb * tn * 4))
    vmem_limit = int(min(cap * 0.9, max(2 * need, 32 * 1024 * 1024)))

    w_spec = pl.BlockSpec((tk, tn), lambda i, j, k: (k, j))
    if w_buffer_count != 2:
        # Deeper buffering of the weight stream if profiling shows exposed DMA.
        w_spec = pl.BlockSpec((tk, tn), lambda i, j, k: (k, j),
                              pipeline_mode=pl.Buffered(w_buffer_count))

    cost = pl.CostEstimate(
        flops=2 * B * K * N,
        transcendentals=0,
        # x re-read once per N tile, W once per batch tile, output written once.
        bytes_accessed=in_isz * (B * K * grid_n + K * N * grid_b) + out_isz * B * N,
    )

    out_p = pl.pallas_call(
        kernel,
        out_shape=jax.ShapeDtypeStruct((Bp, Np), out_dtype),
        grid_spec=pltpu.PrefetchScalarGridSpec(
            num_scalar_prefetch=0,
            grid=grid,
            in_specs=[
                pl.BlockSpec((tb, tk), lambda i, j, k: (i, k)),  # x slab
                w_spec,                                          # W slab, (K, N) layout
            ],
            out_specs=pl.BlockSpec((tb, tn), lambda i, j, k: (i, j)),
            scratch_shapes=scratch,
        ),
        compiler_params=pltpu.CompilerParams(
            dimension_semantics=("parallel", "parallel", "arbitrary"),
            vmem_limit_bytes=vmem_limit,
        ),
        cost_estimate=cost,
    )(x_c, w_kn)

    if (Bp, Np) == (B, N):
        return out_p
    return out_p[:B, :N]


class OneLayerNoPartitionModel:
    """Pallas equivalent of the PyTorch module: a single bias-free LinearLayer."""

    def __init__(self, weights, compute_dtype=None):
        self._prepared = prepare_weight(weights, compute_dtype=compute_dtype)

    def __call__(self, x):
        return linear_forward(x, self._prepared)


if __name__ == "__main__":
    key = jax.random.PRNGKey(0)
    k_x, k_w, k_x2, k_w2 = jax.random.split(key, 4)

    # 1) Small shapes matching the module demo (padded internally to (8,128) tiles).
    batch, in_features, out_features = 8, 32, 16
    x = jax.random.normal(k_x, (batch, in_features), dtype=jnp.float32)
    weight = jax.random.normal(k_w, (out_features, in_features), dtype=jnp.float32) * 0.1

    model = OneLayerNoPartitionModel(weight)       # one-time (K,N) layout + pad
    y = jax.block_until_ready(model(x))
    y_ref = x @ weight.T
    assert y.shape == (batch, out_features)
    assert jnp.allclose(y, y_ref, atol=1e-5, rtol=1e-5), "mismatch vs reference (small)"

    # 2) Larger, ragged shapes exercising K accumulation, the parallel N split and
    #    pad/slice (N not a multiple of 128).
    Bl, Kl, Nl = 512, 384, 320
    x2 = jax.random.normal(k_x2, (Bl, Kl), dtype=jnp.float32)
    w2 = jax.random.normal(k_w2, (Nl, Kl), dtype=jnp.float32) * 0.05
    prep2 = prepare_weight(w2)
    y2 = jax.block_until_ready(linear_forward(x2, prep2, tile_k=128))
    y2_ref = x2 @ w2.T
    assert y2.shape == (Bl, Nl)
    assert jnp.allclose(y2, y2_ref, atol=1e-3, rtol=1e-3), "mismatch vs reference (tiled)"

    # 3) Opt-in bf16 compute path (halves HBM bytes; f32 accumulation retained).
    prep_bf16 = prepare_weight(w2, compute_dtype=jnp.bfloat16)
    y3 = jax.block_until_ready(linear_forward(x2, prep_bf16))
    assert jnp.allclose(y3, y2_ref, atol=5e-2, rtol=5e-2), "mismatch vs reference (bf16)"

    # TODO(synk): torch.distributed setup in the original model has no Pallas equivalent
    # (and is unused by this no-partition forward).
    print("KERNEL_OK")
</pallas_src>

<mosaic_0001>
module attributes {stable_mosaic.version = 11 : i64} {
  func.func @_linear_kernel_inplace(%arg0: i32, %arg1: i32, %arg2: i32, %arg3: memref<8x128xf32, #tpu.memory_space<vmem>>, %arg4: memref<128x128xf32, #tpu.memory_space<vmem>>, %arg5: memref<8x128xf32, #tpu.memory_space<vmem>>) attributes {dimension_semantics = [#tpu.dimension_semantics<parallel>, #tpu.dimension_semantics<parallel>, #tpu.dimension_semantics<arbitrary>], iteration_bounds = array<i64: 1, 1, 1>, scalar_prefetch = 0 : i64, scratch_operands = 0 : i64, tpu.core_type = #tpu.core_type<tc>, window_params = [{transform_indices = @transform_0, window_bounds = array<i64: 8, 128>}, {transform_indices = @transform_1, window_bounds = array<i64: 128, 128>}, {transform_indices = @transform_2, window_bounds = array<i64: 8, 128>}]} {
    %c0 = arith.constant 0 : index
    %c0_0 = arith.constant 0 : index
    %0 = vector.load %arg3[%c0, %c0_0] : memref<8x128xf32, #tpu.memory_space<vmem>>, vector<8x128xf32>
    %c0_1 = arith.constant 0 : index
    %c0_2 = arith.constant 0 : index
    %1 = vector.load %arg4[%c0_1, %c0_2] : memref<128x128xf32, #tpu.memory_space<vmem>>, vector<128x128xf32>
    %cst = arith.constant dense<0.000000e+00> : vector<8x128xf32>
    %2 = tpu.matmul %0, %1, %cst {dimension_numbers = #tpu.dot_dimension_numbers<[1], [0], [0], [1], [0, 0, 1, 1], [], []>} : vector<8x128xf32>, vector<128x128xf32>, vector<8x128xf32> -> vector<8x128xf32>
    %c0_i32 = arith.constant 0 : i32
    %3 = arith.cmpi eq, %arg2, %c0_i32 : i32
    %4 = arith.extui %3 : i1 to i32
    %c0_i32_3 = arith.constant 0 : i32
    %5 = arith.cmpi ne, %4, %c0_i32_3 : i32
    scf.if %5 {
      %c0_6 = arith.constant 0 : index
      %c0_7 = arith.constant 0 : index
      %9 = vector.load %arg5[%c0_6, %c0_7] : memref<8x128xf32, #tpu.memory_space<vmem>>, vector<8x128xf32>
      tpu.vector_store %arg5[%c0_6, %c0_7], %2 {strides = array<i32>} : memref<8x128xf32, #tpu.memory_space<vmem>>, vector<8x128xf32>,
    } else {
    }
    %c0_i32_4 = arith.constant 0 : i32
    %6 = arith.cmpi sgt, %arg2, %c0_i32_4 : i32
    %7 = arith.extui %6 : i1 to i32
    %c0_i32_5 = arith.constant 0 : i32
    %8 = arith.cmpi ne, %7, %c0_i32_5 : i32
    scf.if %8 {
      %c0_6 = arith.constant 0 : index
      %c0_7 = arith.constant 0 : index
      %9 = vector.load %arg5[%c0_6, %c0_7] : memref<8x128xf32, #tpu.memory_space<vmem>>, vector<8x128xf32>
      %10 = arith.addf %9, %2 : vector<8x128xf32>
      %c0_8 = arith.constant 0 : index
      %c0_9 = arith.constant 0 : index
      %11 = vector.load %arg5[%c0_8, %c0_9] : memref<8x128xf32, #tpu.memory_space<vmem>>, vector<8x128xf32>
      tpu.vector_store %arg5[%c0_8, %c0_9], %10 {strides = array<i32>} : memref<8x128xf32, #tpu.memory_space<vmem>>, vector<8x128xf32>,
    } else {
    }
    return
  }
  func.func @transform_0(%arg0: i32, %arg1: i32, %arg2: i32) -> (i32, i32) {
    %c0_i32 = arith.constant 0 : i32
    return %arg0, %arg2 : i32, i32
  }
  func.func @transform_1(%arg0: i32, %arg1: i32, %arg2: i32) -> (i32, i32) {
    %c0_i32 = arith.constant 0 : i32
    return %arg2, %arg1 : i32, i32
  }
  func.func @transform_2(%arg0: i32, %arg1: i32, %arg2: i32) -> (i32, i32) {
    %c0_i32 = arith.constant 0 : i32
    return %arg0, %arg1 : i32, i32
  }
}

</mosaic_0001>

<llo_original>
// kernel: tpu_custom_call.1
$region0: #{tpu_custom_call.1}
  #allocation0 [shape = 'u32[]', space=smem, size = 0x4, offset = 0x4, fixed_abs, tag = 'smem constant byte address 0x4 - core index']
  #allocation1 [shape = 'u32[144,128]{1,0:T(1,128)}', space=vmem, size = 0x12000, scoped, tag = 'internal scratch']
  %s0 = inlined_call_operand.hbm [shape: f32[8,128], index: 0, kind: input, shape index: {}]
  %s1 = inlined_call_operand.hbm [shape: f32[128,128], index: 1, kind: input, shape index: {}]
  %s2 = inlined_call_operand.hbm [shape: f32[8,128], index: 2, kind: output, shape index: {}]
  %s3 = sld [smem:[#allocation0]]
  $region34: #{tpu_custom_call.1} parent=0
    _
  %s5 = ssub.s32 1, %s3
  %s6 = scalar_select 0, %s5, %s3
  $region1: #{tpu_custom_call.1} parent=0
    #allocation2 [shape = 'u8[4096]{0}', space=vmem, size = 0x1000, scoped, tag = 'input window, operand 0, single buffered']
    #allocation3 [shape = 's32[1]{0}', space=sflag, size = 0x4, scoped, tag = 'scoped memory for tpu_custom_call.1']
    #allocation4 [shape = 's32[1]{0}', space=sflag, size = 0x4, scoped, tag = 'scoped memory for tpu_custom_call.1']
    #allocation5 [shape = 'u8[65536]{0}', space=vmem, size = 0x10000, scoped, tag = 'input window, operand 1, single buffered']
    #allocation6 [shape = 's32[1]{0}', space=sflag, size = 0x4, scoped, tag = 'scoped memory for tpu_custom_call.1']
    #allocation7 [shape = 'u8[4096]{0}', space=vmem, size = 0x1000, scoped, tag = 'output window, operand 0, single buffered']
    %7 = vsyncpa [#allocation3], 0
    %8 = vsyncpa [#allocation6], 0
    %9 = vsyncpa [#allocation4], 0
    // Predicated region
    $region2: #{tpu_custom_call.1} parent=1 // pred_check
      _
    $region3: #{tpu_custom_call.1} parent=1 // pred_check_branch
      %11 = sbr.rel (0) target = $region5
    $region4: #{tpu_custom_call.1} parent=1 // pred_region
      %s13 = ssub.s32 128, 128
      %14 = vsyncadd [#allocation3], %s13
      %s16 = sshll.u32 [#allocation2], 4
      %s17 = int_to_ptr.vmem [resolvable:$true] %s16
      %19 = dma.hbm_to_vmem [thread:$0]  %s0, 128, %s17, [#allocation3]
    $region5: #{tpu_custom_call.1} parent=1 // pred_fallthru
      _
    // Predicated region
    $region6: #{tpu_custom_call.1} parent=1 // pred_check
      _
    $region7: #{tpu_custom_call.1} parent=1 // pred_check_branch
      %21 = sbr.rel (0) target = $region9
    $region8: #{tpu_custom_call.1} parent=1 // pred_region
      %s23 = ssub.s32 2048, 2048
      %24 = vsyncadd [#allocation6], %s23
      %s25 = sshll.u32 [#allocation5], 4
      %s26 = int_to_ptr.vmem [resolvable:$true] %s25
      %31 = dma.hbm_to_vmem [thread:$0]  %s1, 2048, %s26, [#allocation6], 128, 128, 8
    $region9: #{tpu_custom_call.1} parent=1 // pred_fallthru
      _
    // Predicated region
    $region10: #{tpu_custom_call.1} parent=1 // pred_check
      _
    $region11: #{tpu_custom_call.1} parent=1 // pred_check_branch
      %33 = sbr.rel (0) target = $region13
    $region12: #{tpu_custom_call.1} parent=1 // pred_region
      %34 = dma.done [#allocation3], 128
    $region13: #{tpu_custom_call.1} parent=1 // pred_fallthru
      _
    // Predicated region
    $region14: #{tpu_custom_call.1} parent=1 // pred_check
      _
    $region15: #{tpu_custom_call.1} parent=1 // pred_check_branch
      %36 = sbr.rel (0) target = $region17
    $region16: #{tpu_custom_call.1} parent=1 // pred_region
      %37 = dma.done [#allocation6], 2048
    $region17: #{tpu_custom_call.1} parent=1 // pred_fallthru
      _
    %v38 = vld [vmem:[#allocation2] sm:$0xff]
    %v39 = vld [vmem:[#allocation5] sm:$0xff]
    %v40 = vld [vmem:[#allocation5 + $0x8] sm:$0xff]
    %v41 = vld [vmem:[#allocation5 + $0x10] sm:$0xff]
    %v42 = vld [vmem:[#allocation5 + $0x18] sm:$0xff]
    %v43 = vld [vmem:[#allocation5 + $0x20] sm:$0xff]
    %v44 = vld [vmem:[#allocation5 + $0x28] sm:$0xff]
    %v45 = vld [vmem:[#allocation5 + $0x30] sm:$0xff]
    %v46 = vld [vmem:[#allocation5 + $0x38] sm:$0xff]
    %v47 = vld [vmem:[#allocation5 + $0x40] sm:$0xff]
    %v48 = vld [vmem:[#allocation5 + $0x48] sm:$0xff]
    %v49 = vld [vmem:[#allocation5 + $0x50] sm:$0xff]
    %v50 = vld [vmem:[#allocation5 + $0x58] sm:$0xff]
    %v51 = vld [vmem:[#allocation5 + $0x60] sm:$0xff]
    %v52 = vld [vmem:[#allocation5 + $0x68] sm:$0xff]
    %v53 = vld [vmem:[#allocation5 + $0x70] sm:$0xff]
    %v54 = vld [vmem:[#allocation5 + $0x78] sm:$0xff]
    %55 = vmatprep.subr.mxu0 0.0
    %56 = vmatpush1.msra.mxu0 %v39
    %57 = vmatprep.subr.mxu0 0.0
    %58 = vmatpush1.msra.mxu0 %v40
    %59 = vmatprep.subr.mxu0 0.0
    %60 = vmatpush1.msra.mxu0 %v41
    %61 = vmatprep.subr.mxu0 0.0
    %62 = vmatpush1.msra.mxu0 %v42
    %63 = vmatprep.subr.mxu0 0.0
    %64 = vmatpush1.msra.mxu0 %v43
    %65 = vmatprep.subr.mxu0 0.0
    %66 = vmatpush1.msra.mxu0 %v44
    %67 = vmatprep.subr.mxu0 0.0
    %68 = vmatpush1.msra.mxu0 %v45
    %69 = vmatprep.subr.mxu0 0.0
    %70 = vmatpush1.msra.mxu0 %v46
    %71 = vmatprep.subr.mxu0 0.0
    %72 = vmatpush1.msra.mxu0 %v47
    %73 = vmatprep.subr.mxu0 0.0
    %74 = vmatpush1.msra.mxu0 %v48
    %75 = vmatprep.subr.mxu0 0.0
    %76 = vmatpush1.msra.mxu0 %v49
    %77 = vmatprep.subr.mxu0 0.0
    %78 = vmatpush1.msra.mxu0 %v50
    %79 = vmatprep.subr.mxu0 0.0
    %80 = vmatpush1.msra.mxu0 %v51
    %81 = vmatprep.subr.mxu0 0.0
    %82 = vmatpush1.msra.mxu0 %v52
    %83 = vmatprep.subr.mxu0 0.0
    %84 = vmatpush1.msra.mxu0 %v53
    %85 = vmatprep.subr.mxu0 0.0
    %86 = vmatpush1.msra.mxu0 %v54
    %87 = vmatprep.subr.mxu0 0.0
    %88 = vmatpush1.msra.mxu0 0.0
    %89 = vmatprep.subr.mxu0 0.0
    %90 = vmatpush1.msra.mxu0 0.0
    %91 = vmatprep.subr.mxu0 0.0
    %92 = vmatpush1.msra.mxu0 0.0
    %93 = vmatprep.subr.mxu0 0.0
    %94 = vmatpush1.msra.mxu0 0.0
    %95 = vmatprep.subr.mxu0 0.0
    %96 = vmatpush1.msra.mxu0 0.0
    %97 = vmatprep.subr.mxu0 0.0
    %98 = vmatpush1.msra.mxu0 0.0
    %99 = vmatprep.subr.mxu0 0.0
    %100 = vmatpush1.msra.mxu0 0.0
    %101 = vmatprep.subr.mxu0 0.0
    %102 = vmatpush1.msra.mxu0 0.0
    %103 = vmatprep.subr.mxu0 0.0
    %104 = vmatpush1.msra.mxu0 0.0
    %105 = vmatprep.subr.mxu0 0.0
    %106 = vmatpush1.msra.mxu0 0.0
    %107 = vmatprep.subr.mxu0 0.0
    %108 = vmatpush1.msra.mxu0 0.0
    %109 = vmatprep.subr.mxu0 0.0
    %110 = vmatpush1.msra.mxu0 0.0
    %111 = vmatprep.subr.mxu0 0.0
    %112 = vmatpush1.msra.mxu0 0.0
    %113 = vmatprep.subr.mxu0 0.0
    %114 = vmatpush1.msra.mxu0 0.0
    %115 = vmatprep.subr.mxu0 0.0
    %116 = vmatpush1.msra.mxu0 0.0
    %117 = vmatprep.subr.mxu0 0.0
    %118 = vmatpush1.msra.mxu0 0.0
    %119 = vmatprep.mubr.f32.mxu0 0.0
    %120 = vmatmul.mubr.f32.gmra.mrb[0].mxu0 %v38
    %v121 = vpop.f32.mrb[0].mxu0
    %v122 = vadd.f32 0.0, %v121
    %v123 = vpop.f32.mrb[0].mxu0
    %124 = vdwg.mxu0
    %p125 = scmp.eq.s32.totalorder 0, 0
    // Predicated region
    $region18: #{tpu_custom_call.1} parent=1 // pred_check
      %p126 = pneg %p125
    $region19: #{tpu_custom_call.1} parent=1 // pred_check_branch
      %128 = sbr.rel (%p126) target = $region21
    $region20: #{tpu_custom_call.1} parent=1 // pred_region
      %129 = vst [vmem:[#allocation7] sm:$0xff] %v122
    $region21: #{tpu_custom_call.1} parent=1 // pred_fallthru
      _
    %p130 = scmp.gt.s32.totalorder 0, 0
    // Predicated region
    $region22: #{tpu_custom_call.1} parent=1 // pred_check
      %p131 = pneg %p130
    $region23: #{tpu_custom_call.1} parent=1 // pred_check_branch
      %133 = sbr.rel (%p131) target = $region25
    $region24: #{tpu_custom_call.1} parent=1 // pred_region
      %v134 = vld [vmem:[#allocation7] sm:$0xff]
      %v135 = vadd.f32 %v134, %v122
      %136 = vst [vmem:[#allocation7] sm:$0xff] %v135
    $region25: #{tpu_custom_call.1} parent=1 // pred_fallthru
      _
    // Predicated region
    $region26: #{tpu_custom_call.1} parent=1 // pred_check
      _
    $region27: #{tpu_custom_call.1} parent=1 // pred_check_branch
      %138 = sbr.rel (0) target = $region29
    $region28: #{tpu_custom_call.1} parent=1 // pred_region
      %s140 = ssub.s32 128, 128
      %141 = vsyncadd [#allocation4], %s140
      %s143 = sshll.u32 [#allocation7], 4
      %s144 = int_to_ptr.vmem [resolvable:$true] %s143
      %146 = dma.vmem_to_hbm [thread:$0]  %s144, 128, %s2, [#allocation4]
    $region29: #{tpu_custom_call.1} parent=1 // pred_fallthru
      _
    // Predicated region
    $region30: #{tpu_custom_call.1} parent=1 // pred_check
      _
    $region31: #{tpu_custom_call.1} parent=1 // pred_check_branch
      %148 = sbr.rel (0) target = $region33
    $region32: #{tpu_custom_call.1} parent=1 // pred_region
      %149 = dma.done [#allocation4], 128
    $region33: #{tpu_custom_call.1} parent=1 // pred_fallthru
      _
    %150 = vsyncpa [#allocation3], 1
    %151 = vsyncpa [#allocation6], 1
    %152 = vsyncpa [#allocation4], 1

</llo_original>
